<compile_context>
chip_gen: v6e
topology: v6e:2x2x1
jax: 0.10.0
libtpu: 0.0.40
codegen_flags: <defaults>
</compile_context>

<pallas_src>
import functools
from typing import List, Tuple

import jax
import jax.numpy as jnp
from jax.experimental import pallas as pl
from jax.experimental.pallas import tpu as pltpu

LANE = 128          # TPU lane width; hidden/out dims are padded to this
TILE_B_MAX = 256    # batch rows per grid step (fits easily in scoped VMEM on all gens)


def _round_up(x: int, m: int) -> int:
    return ((x + m - 1) // m) * m


# ----------------------------------------------------------------------------
# Parameter init (deterministic, mimics torch orthogonal_init with tanh gain
# 5/3 and zero biases -- synthetic weights, not a checkpoint load).
# ----------------------------------------------------------------------------
def orthogonal(key, shape, gain):
    n_rows, n_cols = shape
    flat_shape = (max(n_rows, n_cols), min(n_rows, n_cols))
    a = jax.random.normal(key, flat_shape, dtype=jnp.float32)
    q, r = jnp.linalg.qr(a)
    d = jnp.diagonal(r)
    q = q * jnp.where(d == 0, 1.0, jnp.sign(d))[None, :]   # avoid zeroing a column
    if n_rows < n_cols:
        q = q.T
    return gain * q[:n_rows, :n_cols]


def init_qnetwork_params(key, input_dim: int, layer_dims: List[int]
                         ) -> List[Tuple[jnp.ndarray, jnp.ndarray]]:
    gain = 5.0 / 3.0  # torch.nn.init.calculate_gain('tanh')
    params = []
    in_dim = input_dim
    for out_dim in layer_dims:
        key, sub = jax.random.split(key)
        w = orthogonal(sub, (in_dim, out_dim), gain)     # (in, out), x @ W + b layout
        b = jnp.zeros((out_dim,), dtype=jnp.float32)
        params.append((w, b))
        in_dim = out_dim
    return params


# ----------------------------------------------------------------------------
# Kernel-side parameter packing: split layer-0 weight by state/action, zero-pad
# feature dims to the 128-lane width, cast matmul operands to bf16.
# ----------------------------------------------------------------------------
def pack_qnetwork_params(params, state_dim: int, compute_dtype=jnp.bfloat16):
    packed = []
    for i, (w, b) in enumerate(params):
        in_dim, out_dim = w.shape
        out_pad = _round_up(out_dim, LANE)
        in_pad = in_dim if i == 0 else _round_up(in_dim, LANE)
        w_p = jnp.zeros((in_pad, out_pad), jnp.float32).at[:in_dim, :out_dim].set(w)
        b_p = jnp.zeros((1, out_pad), jnp.float32).at[0, :out_dim].set(b)
        if i == 0:
            packed.append(w_p[:state_dim].astype(compute_dtype))   # Ws (state_dim, H1p)
            packed.append(w_p[state_dim:].astype(compute_dtype))   # Wa (action_dim, H1p)
        else:
            packed.append(w_p.astype(compute_dtype))
        packed.append(b_p)                                         # bias stays f32
    return packed


# ----------------------------------------------------------------------------
# Pallas kernel: one batch tile per grid step, full MLP in VMEM.
# Refs: state_tile, action_tile, Ws, Wa, b0, W1, b1, ..., out_tile
# ----------------------------------------------------------------------------
def _qnet_kernel(num_layers, s_ref, a_ref, *refs):
    out_ref = refs[-1]
    prefs = refs[:-1]

    # Layer 0: fused concat via split first-layer weight (bf16 MXU, f32 acc).
    ws_ref, wa_ref, b0_ref = prefs[0], prefs[1], prefs[2]
    h = (jnp.dot(s_ref[...], ws_ref[...], preferred_element_type=jnp.float32)
         + jnp.dot(a_ref[...], wa_ref[...], preferred_element_type=jnp.float32)
         + b0_ref[...])
    if num_layers > 1:
        h = jnp.maximum(h, 0.0)

    idx = 3
    for layer in range(1, num_layers):
        w_ref, b_ref = prefs[idx], prefs[idx + 1]
        idx += 2
        h = jnp.dot(h.astype(w_ref.dtype), w_ref[...],
                    preferred_element_type=jnp.float32) + b_ref[...]
        if layer < num_layers - 1:       # ReLU on hidden layers only
            h = jnp.maximum(h, 0.0)

    out_ref[...] = h.astype(out_ref.dtype)   # lane-dense (TILE_B, 128) store


def qnetwork_forward(state, action, packed_params, num_layers,
                     compute_dtype=jnp.bfloat16):
    B, state_dim = state.shape
    action_dim = action.shape[1]
    out_pad = packed_params[-2].shape[1]     # padded output width (== LANE)

    tile_b = min(TILE_B_MAX, _round_up(B, 16))
    b_pad = _round_up(B, tile_b)

    s = state.astype(compute_dtype)
    a = action.astype(compute_dtype)
    if b_pad != B:
        s = jnp.pad(s, ((0, b_pad - B), (0, 0)))
        a = jnp.pad(a, ((0, b_pad - B), (0, 0)))

    grid = (b_pad // tile_b,)

    def row_spec(feat):
        return pl.BlockSpec((tile_b, feat), lambda i: (i, 0))

    # Weights/biases: constant block index -> fetched once, VMEM-resident.
    param_specs = [pl.BlockSpec(p.shape, lambda i: (0, 0)) for p in packed_params]

    kernel = functools.partial(_qnet_kernel, num_layers)
    out = pl.pallas_call(
        kernel,
        out_shape=jax.ShapeDtypeStruct((b_pad, out_pad), jnp.float32),
        grid=grid,
        in_specs=[row_spec(state_dim), row_spec(action_dim)] + param_specs,
        out_specs=row_spec(out_pad),
        compiler_params=pltpu.CompilerParams(
            dimension_semantics=("parallel",),
            vmem_limit_bytes=32 << 20,
        ),
    )(s, a, *packed_params)

    return out[:B, :1]   # Q value lives in column 0 of the padded slab


# ----------------------------------------------------------------------------
# Pure-JAX references
# ----------------------------------------------------------------------------
def qnetwork_ref_f32(state, action, params):
    h = jnp.concatenate([state, action], axis=1).astype(jnp.float32)
    for i, (w, b) in enumerate(params):
        h = h @ w + b[None, :]
        if i < len(params) - 1:
            h = jnp.maximum(h, 0.0)
    return h


def qnetwork_ref_bf16(state, action, params):
    # Same bf16-operand / f32-accumulate arithmetic as the kernel.
    h = jnp.concatenate([state, action], axis=1).astype(jnp.float32)
    for i, (w, b) in enumerate(params):
        h = jnp.dot(h.astype(jnp.bfloat16), w.astype(jnp.bfloat16),
                    preferred_element_type=jnp.float32) + b[None, :]
        if i < len(params) - 1:
            h = jnp.maximum(h, 0.0)
    return h


if __name__ == "__main__":
    key = jax.random.PRNGKey(0)

    batch = 8
    state_dim = 16
    action_dim = 8
    hidden_dims = [32, 32]
    layer_dims = hidden_dims + [1]            # QNetwork: output_dim = 1

    k_state, k_action, k_params = jax.random.split(key, 3)
    state = jax.random.normal(k_state, (batch, state_dim), dtype=jnp.float32)
    action = jax.random.normal(k_action, (batch, action_dim), dtype=jnp.float32)

    params = init_qnetwork_params(k_params, state_dim + action_dim, layer_dims)
    packed = pack_qnetwork_params(params, state_dim)

    out = qnetwork_forward(state, action, packed, num_layers=len(params))
    out = jax.block_until_ready(out)
    assert out.shape == (batch, 1), out.shape

    # Strict check vs. a reference with identical bf16/f32 arithmetic.
    ref_bf16 = qnetwork_ref_bf16(state, action, params)
    assert jnp.allclose(out, ref_bf16, atol=1e-2, rtol=1e-2), (out, ref_bf16)

    # Looser sanity check vs. the pure-f32 module semantics (bf16 rounding slack).
    ref_f32 = qnetwork_ref_f32(state, action, params)
    assert jnp.allclose(out, ref_f32, atol=0.15, rtol=0.05), (out, ref_f32)

    print("KERNEL_OK")
</pallas_src>

<mosaic_0001>
module attributes {stable_mosaic.version = 11 : i64} {
  func.func @_qnet_kernel(%arg0: i32, %arg1: memref<16x16xbf16, #tpu.memory_space<vmem>>, %arg2: memref<16x8xbf16, #tpu.memory_space<vmem>>, %arg3: memref<16x128xbf16, #tpu.memory_space<vmem>>, %arg4: memref<8x128xbf16, #tpu.memory_space<vmem>>, %arg5: memref<1x128xf32, #tpu.memory_space<vmem>>, %arg6: memref<128x128xbf16, #tpu.memory_space<vmem>>, %arg7: memref<1x128xf32, #tpu.memory_space<vmem>>, %arg8: memref<128x128xbf16, #tpu.memory_space<vmem>>, %arg9: memref<1x128xf32, #tpu.memory_space<vmem>>, %arg10: memref<16x128xf32, #tpu.memory_space<vmem>>) attributes {dimension_semantics = [#tpu.dimension_semantics<parallel>], iteration_bounds = array<i64: 1>, scalar_prefetch = 0 : i64, scratch_operands = 0 : i64, tpu.core_type = #tpu.core_type<tc>, window_params = [{transform_indices = @transform_0, window_bounds = array<i64: 16, 16>}, {transform_indices = @transform_1, window_bounds = array<i64: 16, 8>}, {pipeline_mode = #tpu.pipeline_mode<synchronous>, transform_indices = @transform_2, window_bounds = array<i64: 16, 128>}, {pipeline_mode = #tpu.pipeline_mode<synchronous>, transform_indices = @transform_3, window_bounds = array<i64: 8, 128>}, {pipeline_mode = #tpu.pipeline_mode<synchronous>, transform_indices = @transform_4, window_bounds = array<i64: 1, 128>}, {pipeline_mode = #tpu.pipeline_mode<synchronous>, transform_indices = @transform_5, window_bounds = array<i64: 128, 128>}, {pipeline_mode = #tpu.pipeline_mode<synchronous>, transform_indices = @transform_6, window_bounds = array<i64: 1, 128>}, {pipeline_mode = #tpu.pipeline_mode<synchronous>, transform_indices = @transform_7, window_bounds = array<i64: 128, 128>}, {pipeline_mode = #tpu.pipeline_mode<synchronous>, transform_indices = @transform_8, window_bounds = array<i64: 1, 128>}, {transform_indices = @transform_9, window_bounds = array<i64: 16, 128>}]} {
    %c0 = arith.constant 0 : index
    %c0_0 = arith.constant 0 : index
    %0 = vector.load %arg1[%c0, %c0_0] : memref<16x16xbf16, #tpu.memory_space<vmem>>, vector<16x16xbf16>
    %c0_1 = arith.constant 0 : index
    %c0_2 = arith.constant 0 : index
    %1 = vector.load %arg3[%c0_1, %c0_2] : memref<16x128xbf16, #tpu.memory_space<vmem>>, vector<16x128xbf16>
    %cst = arith.constant dense<0.000000e+00> : vector<16x128xf32>
    %2 = tpu.matmul %0, %1, %cst {dimension_numbers = #tpu.dot_dimension_numbers<[1], [0], [0], [1], [0, 0, 1, 1], [], []>} : vector<16x16xbf16>, vector<16x128xbf16>, vector<16x128xf32> -> vector<16x128xf32>
    %c0_3 = arith.constant 0 : index
    %c0_4 = arith.constant 0 : index
    %3 = vector.load %arg2[%c0_3, %c0_4] : memref<16x8xbf16, #tpu.memory_space<vmem>>, vector<16x8xbf16>
    %c0_5 = arith.constant 0 : index
    %c0_6 = arith.constant 0 : index
    %4 = vector.load %arg4[%c0_5, %c0_6] : memref<8x128xbf16, #tpu.memory_space<vmem>>, vector<8x128xbf16>
    %cst_7 = arith.constant dense<0.000000e+00> : vector<16x128xf32>
    %5 = tpu.matmul %3, %4, %cst_7 {dimension_numbers = #tpu.dot_dimension_numbers<[1], [0], [0], [1], [0, 0, 1, 1], [], []>} : vector<16x8xbf16>, vector<8x128xbf16>, vector<16x128xf32> -> vector<16x128xf32>
    %6 = arith.addf %2, %5 : vector<16x128xf32>
    %c0_8 = arith.constant 0 : index
    %c0_9 = arith.constant 0 : index
    %7 = vector.load %arg5[%c0_8, %c0_9] : memref<1x128xf32, #tpu.memory_space<vmem>>, vector<1x128xf32>
    %8 = vector.broadcast %7 : vector<1x128xf32> to vector<16x128xf32>
    %9 = arith.addf %6, %8 : vector<16x128xf32>
    %cst_10 = arith.constant 0.000000e+00 : f32
    %10 = vector.broadcast %cst_10 : f32 to vector<16x128xf32>
    %11 = arith.maximumf %9, %10 : vector<16x128xf32>
    %12 = arith.truncf %11 : vector<16x128xf32> to vector<16x128xbf16>
    %c0_11 = arith.constant 0 : index
    %c0_12 = arith.constant 0 : index
    %13 = vector.load %arg6[%c0_11, %c0_12] : memref<128x128xbf16, #tpu.memory_space<vmem>>, vector<128x128xbf16>
    %cst_13 = arith.constant dense<0.000000e+00> : vector<16x128xf32>
    %14 = tpu.matmul %12, %13, %cst_13 {dimension_numbers = #tpu.dot_dimension_numbers<[1], [0], [0], [1], [0, 0, 1, 1], [], []>} : vector<16x128xbf16>, vector<128x128xbf16>, vector<16x128xf32> -> vector<16x128xf32>
    %c0_14 = arith.constant 0 : index
    %c0_15 = arith.constant 0 : index
    %15 = vector.load %arg7[%c0_14, %c0_15] : memref<1x128xf32, #tpu.memory_space<vmem>>, vector<1x128xf32>
    %16 = vector.broadcast %15 : vector<1x128xf32> to vector<16x128xf32>
    %17 = arith.addf %14, %16 : vector<16x128xf32>
    %cst_16 = arith.constant 0.000000e+00 : f32
    %18 = vector.broadcast %cst_16 : f32 to vector<16x128xf32>
    %19 = arith.maximumf %17, %18 : vector<16x128xf32>
    %20 = arith.truncf %19 : vector<16x128xf32> to vector<16x128xbf16>
    %c0_17 = arith.constant 0 : index
    %c0_18 = arith.constant 0 : index
    %21 = vector.load %arg8[%c0_17, %c0_18] : memref<128x128xbf16, #tpu.memory_space<vmem>>, vector<128x128xbf16>
    %cst_19 = arith.constant dense<0.000000e+00> : vector<16x128xf32>
    %22 = tpu.matmul %20, %21, %cst_19 {dimension_numbers = #tpu.dot_dimension_numbers<[1], [0], [0], [1], [0, 0, 1, 1], [], []>} : vector<16x128xbf16>, vector<128x128xbf16>, vector<16x128xf32> -> vector<16x128xf32>
    %c0_20 = arith.constant 0 : index
    %c0_21 = arith.constant 0 : index
    %23 = vector.load %arg9[%c0_20, %c0_21] : memref<1x128xf32, #tpu.memory_space<vmem>>, vector<1x128xf32>
    %24 = vector.broadcast %23 : vector<1x128xf32> to vector<16x128xf32>
    %25 = arith.addf %22, %24 : vector<16x128xf32>
    %c0_22 = arith.constant 0 : index
    %c0_23 = arith.constant 0 : index
    %26 = vector.load %arg10[%c0_22, %c0_23] : memref<16x128xf32, #tpu.memory_space<vmem>>, vector<16x128xf32>
    tpu.vector_store %arg10[%c0_22, %c0_23], %25 {strides = array<i32>} : memref<16x128xf32, #tpu.memory_space<vmem>>, vector<16x128xf32>,
    return
  }
  func.func @transform_0(%arg0: i32) -> (i32, i32) {
    %c0_i32 = arith.constant 0 : i32
    %c0_i32_0 = arith.constant 0 : i32
    return %arg0, %c0_i32 : i32, i32
  }
  func.func @transform_1(%arg0: i32) -> (i32, i32) {
    %c0_i32 = arith.constant 0 : i32
    %c0_i32_0 = arith.constant 0 : i32
    return %arg0, %c0_i32 : i32, i32
  }
  func.func @transform_2(%arg0: i32) -> (i32, i32) {
    %c0_i32 = arith.constant 0 : i32
    %c0_i32_0 = arith.constant 0 : i32
    %c0_i32_1 = arith.constant 0 : i32
    return %c0_i32, %c0_i32_0 : i32, i32
  }
  func.func @transform_3(%arg0: i32) -> (i32, i32) {
    %c0_i32 = arith.constant 0 : i32
    %c0_i32_0 = arith.constant 0 : i32
    %c0_i32_1 = arith.constant 0 : i32
    return %c0_i32, %c0_i32_0 : i32, i32
  }
  func.func @transform_4(%arg0: i32) -> (i32, i32) {
    %c0_i32 = arith.constant 0 : i32
    %c0_i32_0 = arith.constant 0 : i32
    %c0_i32_1 = arith.constant 0 : i32
    return %c0_i32, %c0_i32_0 : i32, i32
  }
  func.func @transform_5(%arg0: i32) -> (i32, i32) {
    %c0_i32 = arith.constant 0 : i32
    %c0_i32_0 = arith.constant 0 : i32
    %c0_i32_1 = arith.constant 0 : i32
    return %c0_i32, %c0_i32_0 : i32, i32
  }
  func.func @transform_6(%arg0: i32) -> (i32, i32) {
    %c0_i32 = arith.constant 0 : i32
    %c0_i32_0 = arith.constant 0 : i32
    %c0_i32_1 = arith.constant 0 : i32
    return %c0_i32, %c0_i32_0 : i32, i32
  }
  func.func @transform_7(%arg0: i32) -> (i32, i32) {
    %c0_i32 = arith.constant 0 : i32
    %c0_i32_0 = arith.constant 0 : i32
    %c0_i32_1 = arith.constant 0 : i32
    return %c0_i32, %c0_i32_0 : i32, i32
  }
  func.func @transform_8(%arg0: i32) -> (i32, i32) {
    %c0_i32 = arith.constant 0 : i32
    %c0_i32_0 = arith.constant 0 : i32
    %c0_i32_1 = arith.constant 0 : i32
    return %c0_i32, %c0_i32_0 : i32, i32
  }
  func.func @transform_9(%arg0: i32) -> (i32, i32) {
    %c0_i32 = arith.constant 0 : i32
    %c0_i32_0 = arith.constant 0 : i32
    return %arg0, %c0_i32 : i32, i32
  }
}

</mosaic_0001>

<llo_original>
// kernel: tpu_custom_call.1
$region0: #{tpu_custom_call.1}
  #allocation0 [shape = 'u32[]', space=smem, size = 0x4, offset = 0x4, fixed_abs, tag = 'smem constant byte address 0x4 - core index']
  #allocation1 [shape = 'u32[144,128]{1,0:T(1,128)}', space=vmem, size = 0x12000, scoped, tag = 'internal scratch']
  %s0 = inlined_call_operand.vmem [shape: bf16[16,16], index: 0, kind: input, shape index: {}]
  %s1 = inlined_call_operand.vmem [shape: bf16[16,8], index: 1, kind: input, shape index: {}]
  %s2 = inlined_call_operand.hbm [shape: bf16[16,128], index: 2, kind: input, shape index: {}]
  %s3 = inlined_call_operand.vmem [shape: bf16[8,128], index: 3, kind: input, shape index: {}]
  %s4 = inlined_call_operand.vmem [shape: f32[1,128], index: 4, kind: input, shape index: {}]
  %s5 = inlined_call_operand.hbm [shape: bf16[128,128], index: 5, kind: input, shape index: {}]
  %s6 = inlined_call_operand.vmem [shape: f32[1,128], index: 6, kind: input, shape index: {}]
  %s7 = inlined_call_operand.hbm [shape: bf16[128,128], index: 7, kind: input, shape index: {}]
  %s8 = inlined_call_operand.vmem [shape: f32[1,128], index: 8, kind: input, shape index: {}]
  %s9 = inlined_call_operand.hbm [shape: f32[16,128], index: 9, kind: output, shape index: {}]
  %s10 = sld [smem:[#allocation0]]
  $region58: #{tpu_custom_call.1} parent=0
    _
  %s12 = ssub.s32 1, %s10
  %s13 = scalar_select 0, %s12, %s10
  $region1: #{tpu_custom_call.1} parent=0
    #allocation2 [shape = 'u8[4096]{0}', space=vmem, size = 0x1000, scoped, tag = 'input window, operand 2, single buffered']
    #allocation3 [shape = 's32[1]{0}', space=sflag, size = 0x4, scoped, tag = 'scoped memory for tpu_custom_call.1']
    #allocation4 [shape = 's32[1]{0}', space=sflag, size = 0x4, scoped, tag = 'scoped memory for tpu_custom_call.1']
    #allocation5 [shape = 'u8[32768]{0}', space=vmem, size = 0x8000, scoped, tag = 'input window, operand 5, single buffered']
    #allocation6 [shape = 's32[1]{0}', space=sflag, size = 0x4, scoped, tag = 'scoped memory for tpu_custom_call.1']
    #allocation7 [shape = 'u8[32768]{0}', space=vmem, size = 0x8000, scoped, tag = 'input window, operand 7, single buffered']
    #allocation8 [shape = 'u8[8192]{0}', space=vmem, size = 0x2000, scoped, tag = 'output window, operand 0, single buffered']
    %14 = vsyncpa [#allocation3], 0
    %15 = vsyncpa [#allocation6], 0
    %16 = vsyncpa [#allocation4], 0
    // Predicated region
    $region2: #{tpu_custom_call.1} parent=1 // pred_check
      _
    $region3: #{tpu_custom_call.1} parent=1 // pred_check_branch
      %18 = sbr.rel (0) target = $region5
    $region4: #{tpu_custom_call.1} parent=1 // pred_region
      _
    $region5: #{tpu_custom_call.1} parent=1 // pred_fallthru
      _
    // Predicated region
    $region6: #{tpu_custom_call.1} parent=1 // pred_check
      _
    $region7: #{tpu_custom_call.1} parent=1 // pred_check_branch
      %20 = sbr.rel (0) target = $region9
    $region8: #{tpu_custom_call.1} parent=1 // pred_region
      _
    $region9: #{tpu_custom_call.1} parent=1 // pred_fallthru
      _
    // Predicated region
    $region10: #{tpu_custom_call.1} parent=1 // pred_check
      _
    $region11: #{tpu_custom_call.1} parent=1 // pred_check_branch
      %22 = sbr.rel (0) target = $region13
    $region12: #{tpu_custom_call.1} parent=1 // pred_region
      %s24 = ssub.s32 128, 128
      %25 = vsyncadd [#allocation3], %s24
      %s26 = sshll.u32 [#allocation2], 4
      %s27 = int_to_ptr.vmem [resolvable:$true] %s26
      %32 = dma.hbm_to_vmem [thread:$0]  %s2, 128, %s27, [#allocation3], 64, 64, 4
    $region13: #{tpu_custom_call.1} parent=1 // pred_fallthru
      _
    // Predicated region
    $region14: #{tpu_custom_call.1} parent=1 // pred_check
      _
    $region15: #{tpu_custom_call.1} parent=1 // pred_check_branch
      %34 = sbr.rel (0) target = $region17
    $region16: #{tpu_custom_call.1} parent=1 // pred_region
      _
    $region17: #{tpu_custom_call.1} parent=1 // pred_fallthru
      _
    // Predicated region
    $region18: #{tpu_custom_call.1} parent=1 // pred_check
      _
    $region19: #{tpu_custom_call.1} parent=1 // pred_check_branch
      %36 = sbr.rel (0) target = $region21
    $region20: #{tpu_custom_call.1} parent=1 // pred_region
      _
    $region21: #{tpu_custom_call.1} parent=1 // pred_fallthru
      _
    // Predicated region
    $region22: #{tpu_custom_call.1} parent=1 // pred_check
      _
    $region23: #{tpu_custom_call.1} parent=1 // pred_check_branch
      %38 = sbr.rel (0) target = $region25
    $region24: #{tpu_custom_call.1} parent=1 // pred_region
      %s40 = ssub.s32 1024, 1024
      %41 = vsyncadd [#allocation6], %s40
      %s42 = sshll.u32 [#allocation5], 4
      %s43 = int_to_ptr.vmem [resolvable:$true] %s42
      %48 = dma.hbm_to_vmem [thread:$0]  %s5, 1024, %s43, [#allocation6], 64, 64, 4
    $region25: #{tpu_custom_call.1} parent=1 // pred_fallthru
      _
    // Predicated region
    $region26: #{tpu_custom_call.1} parent=1 // pred_check
      _
    $region27: #{tpu_custom_call.1} parent=1 // pred_check_branch
      %50 = sbr.rel (0) target = $region29
    $region28: #{tpu_custom_call.1} parent=1 // pred_region
      _
    $region29: #{tpu_custom_call.1} parent=1 // pred_fallthru
      _
    // Predicated region
    $region30: #{tpu_custom_call.1} parent=1 // pred_check
      _
    $region31: #{tpu_custom_call.1} parent=1 // pred_check_branch
      %52 = sbr.rel (0) target = $region33
    $region32: #{tpu_custom_call.1} parent=1 // pred_region
      %s54 = ssub.s32 1024, 1024
      %55 = vsyncadd [#allocation6], %s54
      %s56 = sshll.u32 [#allocation7], 4
      %s57 = int_to_ptr.vmem [resolvable:$true] %s56
      %62 = dma.hbm_to_vmem [thread:$0]  %s7, 1024, %s57, [#allocation6], 64, 64, 4
    $region33: #{tpu_custom_call.1} parent=1 // pred_fallthru
      _
    // Predicated region
    $region34: #{tpu_custom_call.1} parent=1 // pred_check
      _
    $region35: #{tpu_custom_call.1} parent=1 // pred_check_branch
      %64 = sbr.rel (0) target = $region37
    $region36: #{tpu_custom_call.1} parent=1 // pred_region
      _
    $region37: #{tpu_custom_call.1} parent=1 // pred_fallthru
      _
    // Predicated region
    $region38: #{tpu_custom_call.1} parent=1 // pred_check
      _
    $region39: #{tpu_custom_call.1} parent=1 // pred_check_branch
      %66 = sbr.rel (0) target = $region41
    $region40: #{tpu_custom_call.1} parent=1 // pred_region
      %67 = dma.done [#allocation3], 128
    $region41: #{tpu_custom_call.1} parent=1 // pred_fallthru
      _
    // Predicated region
    $region42: #{tpu_custom_call.1} parent=1 // pred_check
      _
    $region43: #{tpu_custom_call.1} parent=1 // pred_check_branch
      %69 = sbr.rel (0) target = $region45
    $region44: #{tpu_custom_call.1} parent=1 // pred_region
      %70 = dma.done [#allocation6], 1024
    $region45: #{tpu_custom_call.1} parent=1 // pred_fallthru
      _
    // Predicated region
    $region46: #{tpu_custom_call.1} parent=1 // pred_check
      _
    $region47: #{tpu_custom_call.1} parent=1 // pred_check_branch
      %72 = sbr.rel (0) target = $region49
    $region48: #{tpu_custom_call.1} parent=1 // pred_region
      %73 = dma.done [#allocation6], 1024
    $region49: #{tpu_custom_call.1} parent=1 // pred_fallthru
      _
    %v75 = vld [vmem:[%s0] sm:$0xf]
    %v76 = vld [vmem:[%s0 + $0x4] sm:$0xf]
    %v77 = vld [vmem:[#allocation2] sm:$0xf]
    %v78 = vld [vmem:[#allocation2 + $0x4] sm:$0xf]
    %v79 = vld [vmem:[%s1] sm:$0xf]
    %v80 = vld [vmem:[%s1 + $0x4] sm:$0xf]
    %v81 = vld [vmem:[%s3] sm:$0xf]
    %v84 = vunpack.c.l.b16 %v79
    %v85 = vunpack.c.l.b16 %v80
    %v86 = vpack.c.b16 %v85, %v84
    %vm87 = vcmask 64512
    %v89 = vsel %vm87, %v86, 0
    %vm91 = vcmask 1043456
    %v93 = vsel %vm91, %v81, 0
    %95 = vmatprep.subr.bf16.mxu0 0
    %96 = vmatpush1.bf16.msra.mxu0 0
    %97 = vmatprep.subr.bf16.mxu0 0
    %98 = vmatpush1.bf16.msra.mxu0 0
    %99 = vmatprep.subr.bf16.mxu0 0
    %100 = vmatpush1.bf16.msra.mxu0 0
    %101 = vmatprep.subr.bf16.mxu0 0
    %102 = vmatpush1.bf16.msra.mxu0 0
    %103 = vmatprep.subr.bf16.mxu0 0
    %104 = vmatpush1.bf16.msra.mxu0 0
    %105 = vmatprep.subr.bf16.mxu0 0
    %106 = vmatpush1.bf16.msra.mxu0 0
    %107 = vmatprep.subr.bf16.mxu0 0
    %108 = vmatpush1.bf16.msra.mxu0 0
    %109 = vmatprep.subr.bf16.mxu0 0
    %110 = vmatpush1.bf16.msra.mxu0 %v93
    %111 = vmatprep.subr.bf16.mxu0 0
    %112 = vmatpush2.bf16.msra.mxu0 0
    %113 = vmatprep.subr.bf16.mxu0 0
    %114 = vmatpush2.bf16.msra.mxu0 0
    %115 = vmatprep.subr.bf16.mxu0 0
    %116 = vmatpush2.bf16.msra.mxu0 0
    %117 = vmatprep.subr.bf16.mxu0 0
    %118 = vmatpush2.bf16.msra.mxu0 0
    %119 = vmatprep.subr.bf16.mxu0 0
    %120 = vmatpush2.bf16.msra.mxu0 0
    %121 = vmatprep.subr.bf16.mxu0 0
    %122 = vmatpush2.bf16.msra.mxu0 0
    %123 = vmatprep.subr.bf16.mxu0 0
    %124 = vmatpush2.bf16.msra.mxu0 0
    %125 = vmatprep.subr.bf16.mxu0 0
    %126 = vmatpush2.bf16.msra.mxu0 0
    %127 = vmatprep.mubr.bf16.mxu0 0
    %128 = vmatmul.mubr.bf16.gmra.mxu0 %v89
    %v129 = vpop.f32.mrf.mxu0
    %v130 = vadd.f32 0.0, %v129
    %v131 = vpop.f32.mrf.mxu0
    %v132 = vpop.f32.mrf.mxu0
    %v133 = vadd.f32 0.0, %v132
    %v134 = vpop.f32.mrf.mxu0
    %135 = vdwg.mxu0
    %v138 = vunpack.c.l.b16 %v75
    %v139 = vunpack.c.l.b16 %v76
    %v140 = vpack.c.b16 %v139, %v138
    %v143 = vunpack.c.l.b16 %v77
    %v144 = vunpack.c.l.b16 %v78
    %v145 = vpack.c.b16 %v144, %v143
    %vm147 = vcmask 130048
    %v149 = vsel %vm147, %v140, 0
    %151 = vmatprep.subr.bf16.mxu0 0
    %152 = vmatpush1.bf16.msra.mxu0 0
    %153 = vmatprep.subr.bf16.mxu0 0
    %154 = vmatpush1.bf16.msra.mxu0 0
    %155 = vmatprep.subr.bf16.mxu0 0
    %156 = vmatpush1.bf16.msra.mxu0 0
    %157 = vmatprep.subr.bf16.mxu0 0
    %158 = vmatpush1.bf16.msra.mxu0 0
    %159 = vmatprep.subr.bf16.mxu0 0
    %160 = vmatpush1.bf16.msra.mxu0 0
    %161 = vmatprep.subr.bf16.mxu0 0
    %162 = vmatpush1.bf16.msra.mxu0 0
    %163 = vmatprep.subr.bf16.mxu0 0
    %164 = vmatpush1.bf16.msra.mxu0 0
    %165 = vmatprep.subr.bf16.mxu0 0
    %166 = vmatpush1.bf16.msra.mxu0 %v145
    %167 = vmatprep.subr.bf16.mxu0 0
    %168 = vmatpush2.bf16.msra.mxu0 0
    %169 = vmatprep.subr.bf16.mxu0 0
    %170 = vmatpush2.bf16.msra.mxu0 0
    %171 = vmatprep.subr.bf16.mxu0 0
    %172 = vmatpush2.bf16.msra.mxu0 0
    %173 = vmatprep.subr.bf16.mxu0 0
    %174 = vmatpush2.bf16.msra.mxu0 0
    %175 = vmatprep.subr.bf16.mxu0 0
    %176 = vmatpush2.bf16.msra.mxu0 0
    %177 = vmatprep.subr.bf16.mxu0 0
    %178 = vmatpush2.bf16.msra.mxu0 0
    %179 = vmatprep.subr.bf16.mxu0 0
    %180 = vmatpush2.bf16.msra.mxu0 0
    %181 = vmatprep.subr.bf16.mxu0 0
    %182 = vmatpush2.bf16.msra.mxu0 0
    %183 = vmatprep.mubr.bf16.mxu0 0
    %184 = vmatmul.mubr.bf16.gmra.mxu0 %v149
    %v185 = vpop.f32.mrf.mxu0
    %v186 = vadd.f32 %v130, %v185
    %v187 = vpop.f32.mrf.mxu0
    %v188 = vpop.f32.mrf.mxu0
    %v189 = vadd.f32 %v133, %v188
    %v190 = vpop.f32.mrf.mxu0
    %191 = vdwg.mxu0
    %v192 = vld [vmem:[%s4] sm:$0x1]
    %v194 = vlaneseq
    %v195 = vshrl.u32 %v194, 7
    %v196 = vsub.s32 0, %v195
    %v197 = vrot.slane %v192, %v196
    %v199 = vadd.f32 %v186, %v197
    %v200 = vadd.f32 %v189, %v197
    %v201 = vmax.f32 %v199, 0.0
    %v202 = vmax.f32 %v200, 0.0
    %v203 = vpack.c.bf16 %v202, %v201
    %v204 = vld [vmem:[#allocation5] sm:$0xf]
    %v205 = vld [vmem:[#allocation5 + $0x4] sm:$0xf]
    %v206 = vld [vmem:[#allocation5 + $0x8] sm:$0xf]
    %v207 = vld [vmem:[#allocation5 + $0xc] sm:$0xf]
    %v208 = vld [vmem:[#allocation5 + $0x10] sm:$0xf]
    %v209 = vld [vmem:[#allocation5 + $0x14] sm:$0xf]
    %v210 = vld [vmem:[#allocation5 + $0x18] sm:$0xf]
    %v211 = vld [vmem:[#allocation5 + $0x1c] sm:$0xf]
    %v212 = vld [vmem:[#allocation5 + $0x20] sm:$0xf]
    %v213 = vld [vmem:[#allocation5 + $0x24] sm:$0xf]
    %v214 = vld [vmem:[#allocation5 + $0x28] sm:$0xf]
    %v215 = vld [vmem:[#allocation5 + $0x2c] sm:$0xf]
    %v216 = vld [vmem:[#allocation5 + $0x30] sm:$0xf]
    %v217 = vld [vmem:[#allocation5 + $0x34] sm:$0xf]
    %v218 = vld [vmem:[#allocation5 + $0x38] sm:$0xf]
    %v219 = vld [vmem:[#allocation5 + $0x3c] sm:$0xf]
    %v220 = vld [vmem:[%s6] sm:$0x1]
    %v222 = vlaneseq
    %v223 = vshrl.u32 %v222, 7
    %v224 = vsub.s32 0, %v223
    %v225 = vrot.slane %v220, %v224
    %v243 = vunpack.c.l.b16 %v204
    %v244 = vunpack.c.l.b16 %v205
    %v245 = vunpack.c.l.b16 %v206
    %v246 = vunpack.c.l.b16 %v207
    %v247 = vunpack.c.l.b16 %v208
    %v248 = vunpack.c.l.b16 %v209
    %v249 = vunpack.c.l.b16 %v210
    %v250 = vunpack.c.l.b16 %v211
    %v251 = vunpack.c.l.b16 %v212
    %v252 = vunpack.c.l.b16 %v213
    %v253 = vunpack.c.l.b16 %v214
    %v254 = vunpack.c.l.b16 %v215
    %v255 = vunpack.c.l.b16 %v216
    %v256 = vunpack.c.l.b16 %v217
    %v257 = vunpack.c.l.b16 %v218
    %v258 = vunpack.c.l.b16 %v219
    %v259 = vpack.c.b16 %v244, %v243
    %v260 = vpack.c.b16 %v246, %v245
    %v261 = vpack.c.b16 %v248, %v247
    %v262 = vpack.c.b16 %v250, %v249
    %v263 = vpack.c.b16 %v252, %v251
    %v264 = vpack.c.b16 %v254, %v253
    %v265 = vpack.c.b16 %v256, %v255
    %v266 = vpack.c.b16 %v258, %v257
    %275 = vmatprep.subr.bf16.mxu0 0
    %276 = vmatpush1.bf16.msra.mxu0 %v266
    %277 = vmatprep.subr.bf16.mxu0 0
    %278 = vmatpush1.bf16.msra.mxu0 %v265
    %279 = vmatprep.subr.bf16.mxu0 0
    %280 = vmatpush1.bf16.msra.mxu0 %v264
    %281 = vmatprep.subr.bf16.mxu0 0
    %282 = vmatpush1.bf16.msra.mxu0 %v263
    %283 = vmatprep.subr.bf16.mxu0 0
    %284 = vmatpush1.bf16.msra.mxu0 %v262
    %285 = vmatprep.subr.bf16.mxu0 0
    %286 = vmatpush1.bf16.msra.mxu0 %v261
    %287 = vmatprep.subr.bf16.mxu0 0
    %288 = vmatpush1.bf16.msra.mxu0 %v260
    %289 = vmatprep.subr.bf16.mxu0 0
    %290 = vmatpush1.bf16.msra.mxu0 %v259
    %291 = vmatprep.subr.bf16.mxu0 0
    %292 = vmatpush2.bf16.msra.mxu0 0
    %293 = vmatprep.subr.bf16.mxu0 0
    %294 = vmatpush2.bf16.msra.mxu0 0
    %295 = vmatprep.subr.bf16.mxu0 0
    %296 = vmatpush2.bf16.msra.mxu0 0
    %297 = vmatprep.subr.bf16.mxu0 0
    %298 = vmatpush2.bf16.msra.mxu0 0
    %299 = vmatprep.subr.bf16.mxu0 0
    %300 = vmatpush2.bf16.msra.mxu0 0
    %301 = vmatprep.subr.bf16.mxu0 0
    %302 = vmatpush2.bf16.msra.mxu0 0
    %303 = vmatprep.subr.bf16.mxu0 0
    %304 = vmatpush2.bf16.msra.mxu0 0
    %305 = vmatprep.subr.bf16.mxu0 0
    %306 = vmatpush2.bf16.msra.mxu0 0
    %307 = vmatprep.mubr.bf16.mxu0 0
    %308 = vmatmul.mubr.bf16.gmra.mxu0 %v203
    %v309 = vpop.f32.mrf.mxu0
    %v310 = vadd.f32 %v225, %v309
    %v311 = vpop.f32.mrf.mxu0
    %v312 = vpop.f32.mrf.mxu0
    %v313 = vadd.f32 %v225, %v312
    %v314 = vpop.f32.mrf.mxu0
    %315 = vdwg.mxu0
    %v316 = vmax.f32 %v310, 0.0
    %v317 = vmax.f32 %v313, 0.0
    %v318 = vpack.c.bf16 %v317, %v316
    %v319 = vld [vmem:[#allocation7] sm:$0xf]
    %v320 = vld [vmem:[#allocation7 + $0x4] sm:$0xf]
    %v321 = vld [vmem:[#allocation7 + $0x8] sm:$0xf]
    %v322 = vld [vmem:[#allocation7 + $0xc] sm:$0xf]
    %v323 = vld [vmem:[#allocation7 + $0x10] sm:$0xf]
    %v324 = vld [vmem:[#allocation7 + $0x14] sm:$0xf]
    %v325 = vld [vmem:[#allocation7 + $0x18] sm:$0xf]
    %v326 = vld [vmem:[#allocation7 + $0x1c] sm:$0xf]
    %v327 = vld [vmem:[#allocation7 + $0x20] sm:$0xf]
    %v328 = vld [vmem:[#allocation7 + $0x24] sm:$0xf]
    %v329 = vld [vmem:[#allocation7 + $0x28] sm:$0xf]
    %v330 = vld [vmem:[#allocation7 + $0x2c] sm:$0xf]
    %v331 = vld [vmem:[#allocation7 + $0x30] sm:$0xf]
    %v332 = vld [vmem:[#allocation7 + $0x34] sm:$0xf]
    %v333 = vld [vmem:[#allocation7 + $0x38] sm:$0xf]
    %v334 = vld [vmem:[#allocation7 + $0x3c] sm:$0xf]
    %v335 = vld [vmem:[%s8] sm:$0x1]
    %v337 = vlaneseq
    %v338 = vshrl.u32 %v337, 7
    %v339 = vsub.s32 0, %v338
    %v340 = vrot.slane %v335, %v339
    %v358 = vunpack.c.l.b16 %v319
    %v359 = vunpack.c.l.b16 %v320
    %v360 = vunpack.c.l.b16 %v321
    %v361 = vunpack.c.l.b16 %v322
    %v362 = vunpack.c.l.b16 %v323
    %v363 = vunpack.c.l.b16 %v324
    %v364 = vunpack.c.l.b16 %v325
    %v365 = vunpack.c.l.b16 %v326
    %v366 = vunpack.c.l.b16 %v327
    %v367 = vunpack.c.l.b16 %v328
    %v368 = vunpack.c.l.b16 %v329
    %v369 = vunpack.c.l.b16 %v330
    %v370 = vunpack.c.l.b16 %v331
    %v371 = vunpack.c.l.b16 %v332
    %v372 = vunpack.c.l.b16 %v333
    %v373 = vunpack.c.l.b16 %v334
    %v374 = vpack.c.b16 %v359, %v358
    %v375 = vpack.c.b16 %v361, %v360
    %v376 = vpack.c.b16 %v363, %v362
    %v377 = vpack.c.b16 %v365, %v364
    %v378 = vpack.c.b16 %v367, %v366
    %v379 = vpack.c.b16 %v369, %v368
    %v380 = vpack.c.b16 %v371, %v370
    %v381 = vpack.c.b16 %v373, %v372
    %390 = vmatprep.subr.bf16.mxu0 0
    %391 = vmatpush1.bf16.msra.mxu0 %v381
    %392 = vmatprep.subr.bf16.mxu0 0
    %393 = vmatpush1.bf16.msra.mxu0 %v380
    %394 = vmatprep.subr.bf16.mxu0 0
    %395 = vmatpush1.bf16.msra.mxu0 %v379
    %396 = vmatprep.subr.bf16.mxu0 0
    %397 = vmatpush1.bf16.msra.mxu0 %v378
    %398 = vmatprep.subr.bf16.mxu0 0
    %399 = vmatpush1.bf16.msra.mxu0 %v377
    %400 = vmatprep.subr.bf16.mxu0 0
    %401 = vmatpush1.bf16.msra.mxu0 %v376
    %402 = vmatprep.subr.bf16.mxu0 0
    %403 = vmatpush1.bf16.msra.mxu0 %v375
    %404 = vmatprep.subr.bf16.mxu0 0
    %405 = vmatpush1.bf16.msra.mxu0 %v374
    %406 = vmatprep.subr.bf16.mxu0 0
    %407 = vmatpush2.bf16.msra.mxu0 0
    %408 = vmatprep.subr.bf16.mxu0 0
    %409 = vmatpush2.bf16.msra.mxu0 0
    %410 = vmatprep.subr.bf16.mxu0 0
    %411 = vmatpush2.bf16.msra.mxu0 0
    %412 = vmatprep.subr.bf16.mxu0 0
    %413 = vmatpush2.bf16.msra.mxu0 0
    %414 = vmatprep.subr.bf16.mxu0 0
    %415 = vmatpush2.bf16.msra.mxu0 0
    %416 = vmatprep.subr.bf16.mxu0 0
    %417 = vmatpush2.bf16.msra.mxu0 0
    %418 = vmatprep.subr.bf16.mxu0 0
    %419 = vmatpush2.bf16.msra.mxu0 0
    %420 = vmatprep.subr.bf16.mxu0 0
    %421 = vmatpush2.bf16.msra.mxu0 0
    %422 = vmatprep.mubr.bf16.mxu0 0
    %423 = vmatmul.mubr.bf16.gmra.mxu0 %v318
    %v424 = vpop.f32.mrf.mxu0
    %v425 = vadd.f32 %v340, %v424
    %v426 = vpop.f32.mrf.mxu0
    %v427 = vpop.f32.mrf.mxu0
    %v428 = vadd.f32 %v340, %v427
    %v429 = vpop.f32.mrf.mxu0
    %430 = vdwg.mxu0
    %431 = vst [vmem:[#allocation8] sm:$0xff] %v425
    %432 = vst [vmem:[#allocation8 + $0x8] sm:$0xff] %v428
    // Predicated region
    $region50: #{tpu_custom_call.1} parent=1 // pred_check
      _
    $region51: #{tpu_custom_call.1} parent=1 // pred_check_branch
      %434 = sbr.rel (0) target = $region53
    $region52: #{tpu_custom_call.1} parent=1 // pred_region
      %s436 = ssub.s32 256, 256
      %437 = vsyncadd [#allocation4], %s436
      %s438 = sshll.u32 [#allocation8], 4
      %s439 = int_to_ptr.vmem [resolvable:$true] %s438
      %444 = dma.vmem_to_hbm [thread:$0]  %s439, 256, %s9, [#allocation4], 128, 128, 8
    $region53: #{tpu_custom_call.1} parent=1 // pred_fallthru
      _
    // Predicated region
    $region54: #{tpu_custom_call.1} parent=1 // pred_check
      _
    $region55: #{tpu_custom_call.1} parent=1 // pred_check_branch
      %446 = sbr.rel (0) target = $region57
    $region56: #{tpu_custom_call.1} parent=1 // pred_region
      %447 = dma.done [#allocation4], 256
    $region57: #{tpu_custom_call.1} parent=1 // pred_fallthru
      _
    %448 = vsyncpa [#allocation3], 1
    %449 = vsyncpa [#allocation6], 1
    %450 = vsyncpa [#allocation4], 1

</llo_original>
